<compile_context>
chip_gen: v5e
topology: v5e:2x2
jax: 0.10.0
libtpu: 0.0.40
codegen_flags: <defaults>
</compile_context>

<pallas_src>
import functools

import jax
import jax.numpy as jnp
from jax import lax
from jax.experimental import pallas as pl
from jax.experimental.pallas import tpu as pltpu

NUM_CANDIDATES = 20   # the module asserts len(scores) == 20
OUT_W = 128           # lane-dense packed output row: [scores(20) | loss | correct | 0-pad]


def ltr_kernel(w_ref, doc_ref, cand_ref, out_ref, *, num_cand):
    """One grid step processes a block of BB independent queries.

    w_ref:    (1, V)       shared pre-softmax weights (resident across steps)
    doc_ref:  (BB, D, V)   doc features
    cand_ref: (BB, C, V)   candidate features (natural layout, no host transpose)
    out_ref:  (BB, OUT_W)  packed: lanes [0:C]=scores, [C]=loss, [C+1]=correct
    """
    V = w_ref.shape[-1]
    bb = out_ref.shape[0]

    # Softmax over the (1, V) weight vector.  Exact divide (not
    # pl.reciprocal(approx=True)): the 10000x hinge would amplify ~1e-3 rel
    # error past the loss tolerance.  Recomputed per step on purpose -- see
    # header note about megacore "parallel" sharding.
    w = w_ref[...]                                          # (1, V)
    e = jnp.exp(w - jnp.max(w, axis=-1, keepdims=True))
    weight = e / jnp.sum(e, axis=-1, keepdims=True)         # (1, V)

    # Apply the weight to the smaller operand (D rows < C rows).
    wdocs = doc_ref[...] * weight.reshape(1, 1, V)          # (BB, D, V)

    # Batched contraction on V; both operands keep their natural layout:
    # (BB, D, V) x (BB, C, V) -> (BB, D, C), candidates on the lane axis.
    sims = jnp.einsum("bdv,bcv->bdc", wdocs, cand_ref[...],
                      preferred_element_type=jnp.float32)

    # Max over docs = sublane reduce -> 2D (BB, C): 8 queries per vreg.
    scores = jnp.max(sims, axis=1)                          # (BB, C)

    # Ground-truth vs. best incorrect via lane masks (no sublane slicing).
    clane = lax.broadcasted_iota(jnp.int32, scores.shape, 1)
    neg = jnp.float32(-jnp.inf)
    gt = jnp.max(jnp.where(clane == num_cand - 1, scores, neg),
                 axis=1, keepdims=True)                     # (BB, 1)
    max_inc = jnp.max(jnp.where(clane < num_cand - 1, scores, neg),
                      axis=1, keepdims=True)                # (BB, 1)

    loss = jnp.maximum(jnp.float32(0.0),
                       10000.0 * (max_inc - gt) + 0.001)    # (BB, 1)
    correct = (gt > max_inc).astype(jnp.float32)            # (BB, 1)

    # Lane-dense 128-wide packed row per query.  One full-width store covers
    # loss/correct/zero-padding lanes; one small masked store places the C
    # score lanes.  The writeback DMA itself is fully lane-dense.
    lane = lax.broadcasted_iota(jnp.int32, (bb, OUT_W), 1)
    tail = jnp.where(lane == num_cand, loss, jnp.float32(0.0))
    tail = jnp.where(lane == num_cand + 1, correct, tail)
    out_ref[...] = tail
    out_ref[:, :num_cand] = scores


def _as_f32(x):
    return x if x.dtype == jnp.float32 else x.astype(jnp.float32)


def ltr_forward_batched(weight_soft, doc_features, cand_features, *, block_b=None):
    """weight_soft: (V,), doc_features: (B, D, V), cand_features: (B, C, V)."""
    B, D, V = doc_features.shape
    Bc, C, Vc = cand_features.shape
    assert Bc == B and Vc == V and weight_soft.shape == (V,)
    assert C == NUM_CANDIDATES, C  # module asserts exactly 20 candidates

    w2 = _as_f32(weight_soft).reshape(1, V)
    docs = _as_f32(doc_features)
    cand = _as_f32(cand_features)          # natural (B, C, V) layout; no extra HBM copy

    # Queries per grid step: 512 amortizes the ~0.35us per-step overhead while
    # keeping the double-buffered, lane-padded blocks well inside v7x's 64 MiB
    # VMEM.  B is padded up to a multiple of the block (no block_b=1 cliff).
    if block_b is None:
        block_b = min(B, 512)
    block_b = max(8, -(-int(block_b) // 8) * 8)   # multiple of 8 (sublane-aligned out block)
    b_pad = -(-B // block_b) * block_b
    if b_pad != B:
        pad = b_pad - B
        docs = jnp.pad(docs, ((0, pad), (0, 0), (0, 0)))
        cand = jnp.pad(cand, ((0, pad), (0, 0), (0, 0)))
    grid = (b_pad // block_b,)

    packed = pl.pallas_call(
        functools.partial(ltr_kernel, num_cand=C),
        out_shape=jax.ShapeDtypeStruct((b_pad, OUT_W), jnp.float32),
        grid=grid,
        in_specs=[
            pl.BlockSpec((1, V), lambda g: (0, 0)),             # shared weights, stays resident
            pl.BlockSpec((block_b, D, V), lambda g: (g, 0, 0)),
            pl.BlockSpec((block_b, C, V), lambda g: (g, 0, 0)),
        ],
        out_specs=pl.BlockSpec((block_b, OUT_W), lambda g: (g, 0)),
        compiler_params=pltpu.CompilerParams(
            dimension_semantics=("parallel",),      # shard batch blocks across TCs
            vmem_limit_bytes=48 * 1024 * 1024,      # padded blocks exceed v5e's 16 MiB default
        ),
    )(w2, docs, cand)

    packed = packed[:B]                                         # drop batch padding
    return {
        "scores": packed[:, :C],
        "loss": packed[:, C],
        "correct": packed[:, C + 1].astype(jnp.int32),
    }


def ltr_forward(weight_soft, doc_features, cand_features):
    """Single-query forward mirroring the PyTorch module's call signature."""
    out = ltr_forward_batched(weight_soft, doc_features[None], cand_features[None])
    return {"scores": out["scores"][0],
            "loss": out["loss"][0],
            "correct": out["correct"][0]}


def ltr_reference(weight_soft, doc_features, cand_features):
    # Pure-JAX reference mirroring the PyTorch loops, vmapped over the batch.
    weight = jax.nn.softmax(weight_soft)

    def one(docs, cands):
        sims = jnp.einsum("cv,dv->cd", cands * weight, docs)
        scores = jnp.max(sims, axis=-1)
        gt = scores[-1]
        max_inc = jnp.max(scores[:-1])
        loss = jnp.maximum(0.0, 10000.0 * (max_inc - gt) + 0.001)
        correct = (gt > max_inc).astype(jnp.int32)
        return scores, loss, correct

    return jax.vmap(one)(doc_features, cand_features)


if __name__ == "__main__":
    vocab_size = 32       # number of hand-crafted retrieval features
    num_docs = 8
    num_candidates = NUM_CANDIDATES
    batch = 8             # batch of independent queries through one pallas_call

    key = jax.random.PRNGKey(0)
    kw, kd, kc = jax.random.split(key, 3)
    # Module init is torch.ones(V); perturb slightly so the softmax is non-trivial.
    weight_soft = (jnp.ones((vocab_size,), jnp.float32)
                   + 0.1 * jax.random.normal(kw, (vocab_size,), jnp.float32))
    doc_features = jax.random.uniform(kd, (batch, num_docs, vocab_size),
                                      dtype=jnp.float32)
    cand_features = jax.random.uniform(kc, (batch, num_candidates, vocab_size),
                                       dtype=jnp.float32)

    out = ltr_forward_batched(weight_soft, doc_features, cand_features)
    jax.block_until_ready(out)

    ref_scores, ref_loss, ref_correct = ltr_reference(weight_soft, doc_features,
                                                      cand_features)
    assert jnp.allclose(out["scores"], ref_scores, atol=1e-4, rtol=1e-4)
    assert jnp.allclose(out["loss"], ref_loss, atol=1e-2, rtol=1e-3)
    assert jnp.array_equal(out["correct"], ref_correct)

    # Single-query path (exercises the B -> multiple-of-block padding too).
    single = ltr_forward(weight_soft, doc_features[0], cand_features[0])
    jax.block_until_ready(single)
    assert jnp.allclose(single["scores"], ref_scores[0], atol=1e-4, rtol=1e-4)
    assert jnp.allclose(single["loss"], ref_loss[0], atol=1e-2, rtol=1e-3)
    assert int(single["correct"]) == int(ref_correct[0])

    # TODO(synk): the module's print() statements and module-global `correct`
    # counter are host-side side effects with no Pallas equivalent.
    print("KERNEL_OK")
</pallas_src>

<mosaic_0001>
module attributes {stable_mosaic.version = 11 : i64} {
  func.func @ltr_kernel(%arg0: i32, %arg1: memref<1x32xf32, #tpu.memory_space<vmem>>, %arg2: memref<8x8x32xf32, #tpu.memory_space<vmem>>, %arg3: memref<8x20x32xf32, #tpu.memory_space<vmem>>, %arg4: memref<8x128xf32, #tpu.memory_space<vmem>>) attributes {dimension_semantics = [#tpu.dimension_semantics<parallel>], iteration_bounds = array<i64: 1>, scalar_prefetch = 0 : i64, scratch_operands = 0 : i64, tpu.core_type = #tpu.core_type<tc>, window_params = [{pipeline_mode = #tpu.pipeline_mode<synchronous>, transform_indices = @transform_0, window_bounds = array<i64: 1, 32>}, {transform_indices = @transform_1, window_bounds = array<i64: 8, 8, 32>}, {transform_indices = @transform_2, window_bounds = array<i64: 8, 20, 32>}, {transform_indices = @transform_3, window_bounds = array<i64: 8, 128>}]} {
    %c0 = arith.constant 0 : index
    %c0_0 = arith.constant 0 : index
    %0 = vector.load %arg1[%c0, %c0_0] : memref<1x32xf32, #tpu.memory_space<vmem>>, vector<1x32xf32>
    %cst = arith.constant dense<0xFF800000> : vector<1xf32>
    %1 = vector.multi_reduction <maximumf>, %0, %cst [1] : vector<1x32xf32> to vector<1xf32>
    %2 = vector.shape_cast %1 : vector<1xf32> to vector<1x1xf32>
    %3 = vector.broadcast %2 : vector<1x1xf32> to vector<1x32xf32>
    %4 = arith.subf %0, %3 : vector<1x32xf32>
    %5 = math.exp %4 : vector<1x32xf32>
    %cst_1 = arith.constant dense<0.000000e+00> : vector<1xf32>
    %6 = vector.multi_reduction <add>, %5, %cst_1 [1] : vector<1x32xf32> to vector<1xf32>
    %7 = vector.shape_cast %6 : vector<1xf32> to vector<1x1xf32>
    %8 = vector.broadcast %7 : vector<1x1xf32> to vector<1x32xf32>
    %9 = arith.divf %5, %8 : vector<1x32xf32>
    %c0_2 = arith.constant 0 : index
    %c0_3 = arith.constant 0 : index
    %c0_4 = arith.constant 0 : index
    %10 = vector.load %arg2[%c0_2, %c0_3, %c0_4] : memref<8x8x32xf32, #tpu.memory_space<vmem>>, vector<8x8x32xf32>
    %11 = vector.shape_cast %9 : vector<1x32xf32> to vector<1x1x32xf32>
    %12 = vector.broadcast %11 : vector<1x1x32xf32> to vector<8x8x32xf32>
    %13 = arith.mulf %10, %12 : vector<8x8x32xf32>
    %c0_5 = arith.constant 0 : index
    %c0_6 = arith.constant 0 : index
    %c0_7 = arith.constant 0 : index
    %14 = vector.load %arg3[%c0_5, %c0_6, %c0_7] : memref<8x20x32xf32, #tpu.memory_space<vmem>>, vector<8x20x32xf32>
    "tpu.trace_start"() <{level = 10 : i32, message = "bdv,bcv->bdc"}> : () -> ()
    %cst_8 = arith.constant dense<0.000000e+00> : vector<8x8x20xf32>
    %15 = tpu.matmul %13, %14, %cst_8 {dimension_numbers = #tpu.dot_dimension_numbers<[2], [2], [1], [1], [0, 0, 0, 1, 1, 1], [0], [0]>} : vector<8x8x32xf32>, vector<8x20x32xf32>, vector<8x8x20xf32> -> vector<8x8x20xf32>
    "tpu.trace_stop"() : () -> ()
    %cst_9 = arith.constant dense<0xFF800000> : vector<8x20xf32>
    %16 = vector.multi_reduction <maximumf>, %15, %cst_9 [1] : vector<8x8x20xf32> to vector<8x20xf32>
    %17 = tpu.iota {dimensions = array<i32: 1>} : vector<8x20xi32>
    %c19_i32 = arith.constant 19 : i32
    %18 = vector.broadcast %c19_i32 : i32 to vector<8x20xi32>
    %19 = arith.cmpi eq, %17, %18 : vector<8x20xi32>
    %cst_10 = arith.constant 0xFF800000 : f32
    %20 = vector.broadcast %cst_10 : f32 to vector<8x20xf32>
    %21 = arith.select %19, %16, %20 : vector<8x20xi1>, vector<8x20xf32>
    %cst_11 = arith.constant dense<0xFF800000> : vector<8xf32>
    %22 = vector.multi_reduction <maximumf>, %21, %cst_11 [1] : vector<8x20xf32> to vector<8xf32>
    %23 = vector.shape_cast %22 : vector<8xf32> to vector<8x1xf32>
    %c19_i32_12 = arith.constant 19 : i32
    %24 = vector.broadcast %c19_i32_12 : i32 to vector<8x20xi32>
    %25 = arith.cmpi slt, %17, %24 : vector<8x20xi32>
    %cst_13 = arith.constant 0xFF800000 : f32
    %26 = vector.broadcast %cst_13 : f32 to vector<8x20xf32>
    %27 = arith.select %25, %16, %26 : vector<8x20xi1>, vector<8x20xf32>
    %cst_14 = arith.constant dense<0xFF800000> : vector<8xf32>
    %28 = vector.multi_reduction <maximumf>, %27, %cst_14 [1] : vector<8x20xf32> to vector<8xf32>
    %29 = vector.shape_cast %28 : vector<8xf32> to vector<8x1xf32>
    %30 = arith.subf %29, %23 : vector<8x1xf32>
    %cst_15 = arith.constant 1.000000e+04 : f32
    %31 = vector.broadcast %cst_15 : f32 to vector<8x1xf32>
    %32 = arith.mulf %31, %30 : vector<8x1xf32>
    %cst_16 = arith.constant 1.000000e-03 : f32
    %33 = vector.broadcast %cst_16 : f32 to vector<8x1xf32>
    %34 = arith.addf %32, %33 : vector<8x1xf32>
    %cst_17 = arith.constant 0.000000e+00 : f32
    %35 = vector.broadcast %cst_17 : f32 to vector<8x1xf32>
    %36 = arith.maximumf %35, %34 : vector<8x1xf32>
    %37 = arith.cmpf ogt, %23, %29 : vector<8x1xf32>
    %38 = arith.extui %37 : vector<8x1xi1> to vector<8x1xi32>
    %39 = arith.sitofp %38 : vector<8x1xi32> to vector<8x1xf32>
    %40 = tpu.iota {dimensions = array<i32: 1>} : vector<8x128xi32>
    %c20_i32 = arith.constant 20 : i32
    %41 = vector.broadcast %c20_i32 : i32 to vector<8x128xi32>
    %42 = arith.cmpi eq, %40, %41 : vector<8x128xi32>
    %cst_18 = arith.constant 0.000000e+00 : f32
    %43 = vector.shape_cast %36 : vector<8x1xf32> to vector<8x1xf32>
    %44 = vector.broadcast %43 : vector<8x1xf32> to vector<8x128xf32>
    %45 = vector.broadcast %cst_18 : f32 to vector<8x128xf32>
    %46 = arith.select %42, %44, %45 : vector<8x128xi1>, vector<8x128xf32>
    %c21_i32 = arith.constant 21 : i32
    %47 = vector.broadcast %c21_i32 : i32 to vector<8x128xi32>
    %48 = arith.cmpi eq, %40, %47 : vector<8x128xi32>
    %49 = vector.shape_cast %39 : vector<8x1xf32> to vector<8x1xf32>
    %50 = vector.broadcast %49 : vector<8x1xf32> to vector<8x128xf32>
    %51 = arith.select %48, %50, %46 : vector<8x128xi1>, vector<8x128xf32>
    %c0_19 = arith.constant 0 : index
    %c0_20 = arith.constant 0 : index
    %52 = vector.load %arg4[%c0_19, %c0_20] : memref<8x128xf32, #tpu.memory_space<vmem>>, vector<8x128xf32>
    tpu.vector_store %arg4[%c0_19, %c0_20], %51 {strides = array<i32>} : memref<8x128xf32, #tpu.memory_space<vmem>>, vector<8x128xf32>,
    %c0_21 = arith.constant 0 : index
    %c0_22 = arith.constant 0 : index
    %53 = vector.load %arg4[%c0_21, %c0_22] : memref<8x128xf32, #tpu.memory_space<vmem>>, vector<8x20xf32>
    tpu.vector_store %arg4[%c0_21, %c0_22], %16 {strides = array<i32>} : memref<8x128xf32, #tpu.memory_space<vmem>>, vector<8x20xf32>,
    return
  }
  func.func @transform_0(%arg0: i32) -> (i32, i32) {
    %c0_i32 = arith.constant 0 : i32
    %c0_i32_0 = arith.constant 0 : i32
    %c0_i32_1 = arith.constant 0 : i32
    return %c0_i32, %c0_i32_0 : i32, i32
  }
  func.func @transform_1(%arg0: i32) -> (i32, i32, i32) {
    %c0_i32 = arith.constant 0 : i32
    %c0_i32_0 = arith.constant 0 : i32
    %c0_i32_1 = arith.constant 0 : i32
    return %arg0, %c0_i32, %c0_i32_0 : i32, i32, i32
  }
  func.func @transform_2(%arg0: i32) -> (i32, i32, i32) {
    %c0_i32 = arith.constant 0 : i32
    %c0_i32_0 = arith.constant 0 : i32
    %c0_i32_1 = arith.constant 0 : i32
    return %arg0, %c0_i32, %c0_i32_0 : i32, i32, i32
  }
  func.func @transform_3(%arg0: i32) -> (i32, i32) {
    %c0_i32 = arith.constant 0 : i32
    %c0_i32_0 = arith.constant 0 : i32
    return %arg0, %c0_i32 : i32, i32
  }
}

</mosaic_0001>

<llo_original>
// kernel: tpu_custom_call.1
$region0: #{tpu_custom_call.1}
  #allocation0 [shape = 'u32[]', space=smem, size = 0x4, offset = 0x4, fixed_abs, tag = 'smem constant byte address 0x4 - core index']
  #allocation1 [shape = 'u32[72,128]{1,0:T(1,128)}', space=vmem, size = 0x9000, scoped, tag = 'internal scratch']
  %s0 = inlined_call_operand.vmem [shape: f32[1,32], index: 0, kind: input, shape index: {}]
  %s1 = inlined_call_operand.vmem [shape: f32[8,8,32], index: 1, kind: input, shape index: {}]
  %s2 = inlined_call_operand.vmem [shape: f32[8,20,32], index: 2, kind: input, shape index: {}]
  %s3 = inlined_call_operand.hbm [shape: f32[8,128], index: 3, kind: output, shape index: {}]
  %s4 = sld [smem:[#allocation0]]
  $region22: #{tpu_custom_call.1} parent=0
    _
  %s6 = ssub.s32 1, %s4
  %s7 = scalar_select 0, %s6, %s4
  $region1: #{tpu_custom_call.1} parent=0
    #allocation2 [shape = 'u8[4096]{0}', space=vmem, size = 0x1000, scoped, tag = 'output window, operand 0, single buffered']
    #allocation3 [shape = 's32[1]{0}', space=sflag, size = 0x4, scoped, tag = 'scoped memory for tpu_custom_call.1']
    %8 = vsyncpa [#allocation3], 0
    // Predicated region
    $region2: #{tpu_custom_call.1} parent=1 // pred_check
      _
    $region3: #{tpu_custom_call.1} parent=1 // pred_check_branch
      %10 = sbr.rel (0) target = $region5
    $region4: #{tpu_custom_call.1} parent=1 // pred_region
      _
    $region5: #{tpu_custom_call.1} parent=1 // pred_fallthru
      _
    // Predicated region
    $region6: #{tpu_custom_call.1} parent=1 // pred_check
      _
    $region7: #{tpu_custom_call.1} parent=1 // pred_check_branch
      %12 = sbr.rel (0) target = $region9
    $region8: #{tpu_custom_call.1} parent=1 // pred_region
      _
    $region9: #{tpu_custom_call.1} parent=1 // pred_fallthru
      _
    // Predicated region
    $region10: #{tpu_custom_call.1} parent=1 // pred_check
      _
    $region11: #{tpu_custom_call.1} parent=1 // pred_check_branch
      %14 = sbr.rel (0) target = $region13
    $region12: #{tpu_custom_call.1} parent=1 // pred_region
      _
    $region13: #{tpu_custom_call.1} parent=1 // pred_fallthru
      _
    %v15 = vld [vmem:[%s0] sm:$0x1]
    %vm16 = vcmask 253952
    %v17 = vsel %vm16, %v15, -inf
    %18 = vmax.xlane.f32.xlu0 %v17
    %v19 = vpop.xlane.xlu0 %18
    %v20 = vsub.f32 %v15, %v19
    %v21 = vmul.f32 %v20, 1.442695
    %v22 = vpow.pop %v21
    %v23 = vsel %vm16, %v22, 0.0
    %24 = vadd.xlane.f32.xlu0 %v23
    %v25 = vpop.xlane.xlu0 %24
    %v26 = vrcp.pop %v25
    %v27 = vmul.f32 %v25, %v26
    %v28 = vsub.f32 1.0, %v27
    %v29 = vmul.f32 %v26, %v28
    %v30 = vadd.f32 %v26, %v29
    %vm31 = vweird.f32 %v25
    %vm32 = vweird.f32 %v26
    %vm33 = vmor %vm31, %vm32
    %v34 = vsel %vm33, %v26, %v30
    %v35 = vand.u32 2147483647, %v25
    %vm36 = vcmp.eq.f32.partialorder %v35, 8.507059e+37
    %v37 = vand.u32 %v25, 2147483648
    %v38 = vor.u32 1.1754944e-38, %v37
    %v39 = vsel %vm36, %v38, %v34
    %v40 = vmul.f32 %v22, %v39
    %v41 = vld [vmem:[%s1] sm:$0xff]
    %v42 = vld [vmem:[%s1 + $0x8] sm:$0xff]
    %v43 = vld [vmem:[%s1 + $0x10] sm:$0xff]
    %v44 = vld [vmem:[%s1 + $0x18] sm:$0xff]
    %v45 = vld [vmem:[%s1 + $0x20] sm:$0xff]
    %v46 = vld [vmem:[%s1 + $0x28] sm:$0xff]
    %v47 = vld [vmem:[%s1 + $0x30] sm:$0xff]
    %v48 = vld [vmem:[%s1 + $0x38] sm:$0xff]
    %v50 = vperm.slane %v40, 0
    %v52 = vmul.f32 %v41, %v50
    %v53 = vmul.f32 %v42, %v50
    %v54 = vmul.f32 %v43, %v50
    %v55 = vmul.f32 %v44, %v50
    %v56 = vmul.f32 %v45, %v50
    %v57 = vmul.f32 %v46, %v50
    %v58 = vmul.f32 %v47, %v50
    %v59 = vmul.f32 %v48, %v50
    %v60 = vld [vmem:[%s2] sm:$0xff]
    %v61 = vld [vmem:[%s2 + $0x8] sm:$0xff]
    %v62 = vld [vmem:[%s2 + $0x10] sm:$0xf]
    %v63 = vld [vmem:[%s2 + $0x18] sm:$0xff]
    %v64 = vld [vmem:[%s2 + $0x20] sm:$0xff]
    %v65 = vld [vmem:[%s2 + $0x28] sm:$0xf]
    %v66 = vld [vmem:[%s2 + $0x30] sm:$0xff]
    %v67 = vld [vmem:[%s2 + $0x38] sm:$0xff]
    %v68 = vld [vmem:[%s2 + $0x40] sm:$0xf]
    %v69 = vld [vmem:[%s2 + $0x48] sm:$0xff]
    %v70 = vld [vmem:[%s2 + $0x50] sm:$0xff]
    %v71 = vld [vmem:[%s2 + $0x58] sm:$0xf]
    %v72 = vld [vmem:[%s2 + $0x60] sm:$0xff]
    %v73 = vld [vmem:[%s2 + $0x68] sm:$0xff]
    %v74 = vld [vmem:[%s2 + $0x70] sm:$0xf]
    %v75 = vld [vmem:[%s2 + $0x78] sm:$0xff]
    %v76 = vld [vmem:[%s2 + $0x80] sm:$0xff]
    %v77 = vld [vmem:[%s2 + $0x88] sm:$0xf]
    %v78 = vld [vmem:[%s2 + $0x90] sm:$0xff]
    %v79 = vld [vmem:[%s2 + $0x98] sm:$0xff]
    %v80 = vld [vmem:[%s2 + $0xa0] sm:$0xf]
    %v81 = vld [vmem:[%s2 + $0xa8] sm:$0xff]
    %v82 = vld [vmem:[%s2 + $0xb0] sm:$0xff]
    %v83 = vld [vmem:[%s2 + $0xb8] sm:$0xf]
    %vm84 = vcmask 261120
    %v86 = vsel %vm84, %v52, 0
    %v89 = vsel %vm84, %v60, 0
    %v92 = vsel %vm84, %v61, 0
    %v95 = vsel %vm84, %v62, 0
    %97 = vmatpush.xpose.msra.mxu0 0.0
    %98 = vmatpush.xpose.msra.mxu0 0.0
    %99 = vmatpush.xpose.msra.mxu0 0.0
    %100 = vmatpush.xpose.msra.mxu0 0.0
    %101 = vmatpush.xpose.msra.mxu0 0.0
    %102 = vmatpush.xpose.msra.mxu0 0.0
    %103 = vmatpush.xpose.msra.mxu0 0.0
    %104 = vmatpush.xpose.msra.mxu0 0.0
    %105 = vmatpush.xpose.msra.mxu0 0.0
    %106 = vmatpush.xpose.msra.mxu0 0.0
    %107 = vmatpush.xpose.msra.mxu0 0.0
    %108 = vmatpush.xpose.msra.mxu0 0.0
    %109 = vmatpush.xpose.msra.mxu0 0.0
    %110 = vmatpush.xpose.msra.mxu0 %v95
    %111 = vmatpush.xpose.msra.mxu0 %v92
    %112 = vmatpush.xpose.msra.mxu0 %v89
    %113 = vmatmul.f32.gmra.mxu0 %v86
    %v114 = vpop.f32.mrf.mxu0
    %v115 = vadd.f32 0.0, %v114
    %116 = vdwg.mxu0
    %v118 = vsel %vm84, %v53, 0
    %v121 = vsel %vm84, %v63, 0
    %v124 = vsel %vm84, %v64, 0
    %v127 = vsel %vm84, %v65, 0
    %129 = vmatpush.xpose.msra.mxu0 0.0
    %130 = vmatpush.xpose.msra.mxu0 0.0
    %131 = vmatpush.xpose.msra.mxu0 0.0
    %132 = vmatpush.xpose.msra.mxu0 0.0
    %133 = vmatpush.xpose.msra.mxu0 0.0
    %134 = vmatpush.xpose.msra.mxu0 0.0
    %135 = vmatpush.xpose.msra.mxu0 0.0
    %136 = vmatpush.xpose.msra.mxu0 0.0
    %137 = vmatpush.xpose.msra.mxu0 0.0
    %138 = vmatpush.xpose.msra.mxu0 0.0
    %139 = vmatpush.xpose.msra.mxu0 0.0
    %140 = vmatpush.xpose.msra.mxu0 0.0
    %141 = vmatpush.xpose.msra.mxu0 0.0
    %142 = vmatpush.xpose.msra.mxu0 %v127
    %143 = vmatpush.xpose.msra.mxu0 %v124
    %144 = vmatpush.xpose.msra.mxu0 %v121
    %145 = vmatmul.f32.gmra.mxu0 %v118
    %v146 = vpop.f32.mrf.mxu0
    %v147 = vadd.f32 0.0, %v146
    %148 = vdwg.mxu0
    %v150 = vsel %vm84, %v54, 0
    %v153 = vsel %vm84, %v66, 0
    %v156 = vsel %vm84, %v67, 0
    %v159 = vsel %vm84, %v68, 0
    %161 = vmatpush.xpose.msra.mxu0 0.0
    %162 = vmatpush.xpose.msra.mxu0 0.0
    %163 = vmatpush.xpose.msra.mxu0 0.0
    %164 = vmatpush.xpose.msra.mxu0 0.0
    %165 = vmatpush.xpose.msra.mxu0 0.0
    %166 = vmatpush.xpose.msra.mxu0 0.0
    %167 = vmatpush.xpose.msra.mxu0 0.0
    %168 = vmatpush.xpose.msra.mxu0 0.0
    %169 = vmatpush.xpose.msra.mxu0 0.0
    %170 = vmatpush.xpose.msra.mxu0 0.0
    %171 = vmatpush.xpose.msra.mxu0 0.0
    %172 = vmatpush.xpose.msra.mxu0 0.0
    %173 = vmatpush.xpose.msra.mxu0 0.0
    %174 = vmatpush.xpose.msra.mxu0 %v159
    %175 = vmatpush.xpose.msra.mxu0 %v156
    %176 = vmatpush.xpose.msra.mxu0 %v153
    %177 = vmatmul.f32.gmra.mxu0 %v150
    %v178 = vpop.f32.mrf.mxu0
    %v179 = vadd.f32 0.0, %v178
    %180 = vdwg.mxu0
    %v182 = vsel %vm84, %v55, 0
    %v185 = vsel %vm84, %v69, 0
    %v188 = vsel %vm84, %v70, 0
    %v191 = vsel %vm84, %v71, 0
    %193 = vmatpush.xpose.msra.mxu0 0.0
    %194 = vmatpush.xpose.msra.mxu0 0.0
    %195 = vmatpush.xpose.msra.mxu0 0.0
    %196 = vmatpush.xpose.msra.mxu0 0.0
    %197 = vmatpush.xpose.msra.mxu0 0.0
    %198 = vmatpush.xpose.msra.mxu0 0.0
    %199 = vmatpush.xpose.msra.mxu0 0.0
    %200 = vmatpush.xpose.msra.mxu0 0.0
    %201 = vmatpush.xpose.msra.mxu0 0.0
    %202 = vmatpush.xpose.msra.mxu0 0.0
    %203 = vmatpush.xpose.msra.mxu0 0.0
    %204 = vmatpush.xpose.msra.mxu0 0.0
    %205 = vmatpush.xpose.msra.mxu0 0.0
    %206 = vmatpush.xpose.msra.mxu0 %v191
    %207 = vmatpush.xpose.msra.mxu0 %v188
    %208 = vmatpush.xpose.msra.mxu0 %v185
    %209 = vmatmul.f32.gmra.mxu0 %v182
    %v210 = vpop.f32.mrf.mxu0
    %v211 = vadd.f32 0.0, %v210
    %212 = vdwg.mxu0
    %v214 = vsel %vm84, %v56, 0
    %v217 = vsel %vm84, %v72, 0
    %v220 = vsel %vm84, %v73, 0
    %v223 = vsel %vm84, %v74, 0
    %225 = vmatpush.xpose.msra.mxu0 0.0
    %226 = vmatpush.xpose.msra.mxu0 0.0
    %227 = vmatpush.xpose.msra.mxu0 0.0
    %228 = vmatpush.xpose.msra.mxu0 0.0
    %229 = vmatpush.xpose.msra.mxu0 0.0
    %230 = vmatpush.xpose.msra.mxu0 0.0
    %231 = vmatpush.xpose.msra.mxu0 0.0
    %232 = vmatpush.xpose.msra.mxu0 0.0
    %233 = vmatpush.xpose.msra.mxu0 0.0
    %234 = vmatpush.xpose.msra.mxu0 0.0
    %235 = vmatpush.xpose.msra.mxu0 0.0
    %236 = vmatpush.xpose.msra.mxu0 0.0
    %237 = vmatpush.xpose.msra.mxu0 0.0
    %238 = vmatpush.xpose.msra.mxu0 %v223
    %239 = vmatpush.xpose.msra.mxu0 %v220
    %240 = vmatpush.xpose.msra.mxu0 %v217
    %241 = vmatmul.f32.gmra.mxu0 %v214
    %v242 = vpop.f32.mrf.mxu0
    %v243 = vadd.f32 0.0, %v242
    %244 = vdwg.mxu0
    %v246 = vsel %vm84, %v57, 0
    %v249 = vsel %vm84, %v75, 0
    %v252 = vsel %vm84, %v76, 0
    %v255 = vsel %vm84, %v77, 0
    %257 = vmatpush.xpose.msra.mxu0 0.0
    %258 = vmatpush.xpose.msra.mxu0 0.0
    %259 = vmatpush.xpose.msra.mxu0 0.0
    %260 = vmatpush.xpose.msra.mxu0 0.0
    %261 = vmatpush.xpose.msra.mxu0 0.0
    %262 = vmatpush.xpose.msra.mxu0 0.0
    %263 = vmatpush.xpose.msra.mxu0 0.0
    %264 = vmatpush.xpose.msra.mxu0 0.0
    %265 = vmatpush.xpose.msra.mxu0 0.0
    %266 = vmatpush.xpose.msra.mxu0 0.0
    %267 = vmatpush.xpose.msra.mxu0 0.0
    %268 = vmatpush.xpose.msra.mxu0 0.0
    %269 = vmatpush.xpose.msra.mxu0 0.0
    %270 = vmatpush.xpose.msra.mxu0 %v255
    %271 = vmatpush.xpose.msra.mxu0 %v252
    %272 = vmatpush.xpose.msra.mxu0 %v249
    %273 = vmatmul.f32.gmra.mxu0 %v246
    %v274 = vpop.f32.mrf.mxu0
    %v275 = vadd.f32 0.0, %v274
    %276 = vdwg.mxu0
    %v278 = vsel %vm84, %v58, 0
    %v281 = vsel %vm84, %v78, 0
    %v284 = vsel %vm84, %v79, 0
    %v287 = vsel %vm84, %v80, 0
    %289 = vmatpush.xpose.msra.mxu0 0.0
    %290 = vmatpush.xpose.msra.mxu0 0.0
    %291 = vmatpush.xpose.msra.mxu0 0.0
    %292 = vmatpush.xpose.msra.mxu0 0.0
    %293 = vmatpush.xpose.msra.mxu0 0.0
    %294 = vmatpush.xpose.msra.mxu0 0.0
    %295 = vmatpush.xpose.msra.mxu0 0.0
    %296 = vmatpush.xpose.msra.mxu0 0.0
    %297 = vmatpush.xpose.msra.mxu0 0.0
    %298 = vmatpush.xpose.msra.mxu0 0.0
    %299 = vmatpush.xpose.msra.mxu0 0.0
    %300 = vmatpush.xpose.msra.mxu0 0.0
    %301 = vmatpush.xpose.msra.mxu0 0.0
    %302 = vmatpush.xpose.msra.mxu0 %v287
    %303 = vmatpush.xpose.msra.mxu0 %v284
    %304 = vmatpush.xpose.msra.mxu0 %v281
    %305 = vmatmul.f32.gmra.mxu0 %v278
    %v306 = vpop.f32.mrf.mxu0
    %v307 = vadd.f32 0.0, %v306
    %308 = vdwg.mxu0
    %v310 = vsel %vm84, %v59, 0
    %v313 = vsel %vm84, %v81, 0
    %v316 = vsel %vm84, %v82, 0
    %v319 = vsel %vm84, %v83, 0
    %321 = vmatpush.xpose.msra.mxu0 0.0
    %322 = vmatpush.xpose.msra.mxu0 0.0
    %323 = vmatpush.xpose.msra.mxu0 0.0
    %324 = vmatpush.xpose.msra.mxu0 0.0
    %325 = vmatpush.xpose.msra.mxu0 0.0
    %326 = vmatpush.xpose.msra.mxu0 0.0
    %327 = vmatpush.xpose.msra.mxu0 0.0
    %328 = vmatpush.xpose.msra.mxu0 0.0
    %329 = vmatpush.xpose.msra.mxu0 0.0
    %330 = vmatpush.xpose.msra.mxu0 0.0
    %331 = vmatpush.xpose.msra.mxu0 0.0
    %332 = vmatpush.xpose.msra.mxu0 0.0
    %333 = vmatpush.xpose.msra.mxu0 0.0
    %334 = vmatpush.xpose.msra.mxu0 %v319
    %335 = vmatpush.xpose.msra.mxu0 %v316
    %336 = vmatpush.xpose.msra.mxu0 %v313
    %337 = vmatmul.f32.gmra.mxu0 %v310
    %v338 = vpop.f32.mrf.mxu0
    %v339 = vadd.f32 0.0, %v338
    %340 = vdwg.mxu0
    %vm341 = vcmask 162816
    %v342 = vsel %vm341, %v115, -inf
    %v343 = vrot.slane %v342, 4
    %v344 = vmax.f32 %v342, %v343
    %v345 = vrot.slane %v344, 2
    %v346 = vmax.f32 %v344, %v345
    %v347 = vrot.slane %v346, 1
    %v348 = vmax.f32 %v346, %v347
    %v349 = vsel %vm341, %v147, -inf
    %v350 = vrot.slane %v349, 4
    %v351 = vmax.f32 %v349, %v350
    %v352 = vrot.slane %v351, 2
    %v353 = vmax.f32 %v351, %v352
    %v354 = vrot.slane %v353, 1
    %v355 = vmax.f32 %v353, %v354
    %v356 = vsel %vm341, %v179, -inf
    %v357 = vrot.slane %v356, 4
    %v358 = vmax.f32 %v356, %v357
    %v359 = vrot.slane %v358, 2
    %v360 = vmax.f32 %v358, %v359
    %v361 = vrot.slane %v360, 1
    %v362 = vmax.f32 %v360, %v361
    %v363 = vsel %vm341, %v211, -inf
    %v364 = vrot.slane %v363, 4
    %v365 = vmax.f32 %v363, %v364
    %v366 = vrot.slane %v365, 2
    %v367 = vmax.f32 %v365, %v366
    %v368 = vrot.slane %v367, 1
    %v369 = vmax.f32 %v367, %v368
    %v370 = vsel %vm341, %v243, -inf
    %v371 = vrot.slane %v370, 4
    %v372 = vmax.f32 %v370, %v371
    %v373 = vrot.slane %v372, 2
    %v374 = vmax.f32 %v372, %v373
    %v375 = vrot.slane %v374, 1
    %v376 = vmax.f32 %v374, %v375
    %v377 = vsel %vm341, %v275, -inf
    %v378 = vrot.slane %v377, 4
    %v379 = vmax.f32 %v377, %v378
    %v380 = vrot.slane %v379, 2
    %v381 = vmax.f32 %v379, %v380
    %v382 = vrot.slane %v381, 1
    %v383 = vmax.f32 %v381, %v382
    %v384 = vsel %vm341, %v307, -inf
    %v385 = vrot.slane %v384, 4
    %v386 = vmax.f32 %v384, %v385
    %v387 = vrot.slane %v386, 2
    %v388 = vmax.f32 %v386, %v387
    %v389 = vrot.slane %v388, 1
    %v390 = vmax.f32 %v388, %v389
    %v391 = vsel %vm341, %v339, -inf
    %v392 = vrot.slane %v391, 4
    %v393 = vmax.f32 %v391, %v392
    %v394 = vrot.slane %v393, 2
    %v395 = vmax.f32 %v393, %v394
    %v396 = vrot.slane %v395, 1
    %v397 = vmax.f32 %v395, %v396
    %v398 = vlaneseq
    %v399 = vand.u32 %v398, 127
    %vm400 = vcmp.eq.s32.totalorder %v399, 19
    %vm409 = vcmask 1041409
    %v410 = vsel %vm409, %v355, %v348
    %vm411 = vcmask 1042434
    %v412 = vsel %vm411, %v362, %v410
    %vm413 = vcmask 1043459
    %v414 = vsel %vm413, %v369, %v412
    %vm415 = vcmask 1044484
    %v416 = vsel %vm415, %v376, %v414
    %vm417 = vcmask 1045509
    %v418 = vsel %vm417, %v383, %v416
    %vm419 = vcmask 1046534
    %v420 = vsel %vm419, %v390, %v418
    %vm421 = vcmask 1047559
    %v422 = vsel %vm421, %v397, %v420
    %v424 = vsel %vm400, %v422, -inf
    %v425 = vsel %vm341, %v424, -inf
    %426 = vmax.xlane.f32.xlu0 %v425
    %v427 = vpop.xlane.xlu0 %426
    %vm428 = vcmp.lt.s32.totalorder %v399, 19
    %v429 = vsel %vm428, %v422, -inf
    %v430 = vsel %vm341, %v429, -inf
    %431 = vmax.xlane.f32.xlu0 %v430
    %v432 = vpop.xlane.xlu0 %431
    %v433 = vsub.f32 %v432, %v427
    %v434 = vmul.f32 %v433, 10000.0
    %v435 = vadd.f32 %v434, 0.001
    %v436 = vmax.f32 %v435, 0.0
    %vm437 = vcmp.gt.f32.partialorder %v427, %v432
    %v438 = vsel %vm437, 1, 0
    %v439 = vcvt.s32.f32 %v438
    %vm440 = vcmp.eq.s32.totalorder %v399, 20
    %v441 = vsel %vm440, %v436, 0.0
    %vm442 = vcmp.eq.s32.totalorder %v399, 21
    %v443 = vsel %vm442, %v439, %v441
    %444 = vst [vmem:[#allocation2] sm:$0xff] %v443
    %445 = vst.msk [vmem:[#allocation2] sm:$0xff] %vm341, %v422
    // Predicated region
    $region14: #{tpu_custom_call.1} parent=1 // pred_check
      _
    $region15: #{tpu_custom_call.1} parent=1 // pred_check_branch
      %447 = sbr.rel (0) target = $region17
    $region16: #{tpu_custom_call.1} parent=1 // pred_region
      %449 = vsyncadd [#allocation3], 0
      %s451 = sshll.u32 [#allocation2], 4
      %s452 = int_to_ptr.vmem [resolvable:$true] %s451
      %s453 = sshll.u32 %s3, 4
      %s454 = int_to_ptr.hbm [resolvable:$true] %s453
      %456 = dma.vmem_to_hbm [thread:$0]  %s452, 128, %s454, [#allocation3]
    $region17: #{tpu_custom_call.1} parent=1 // pred_fallthru
      _
    // Predicated region
    $region18: #{tpu_custom_call.1} parent=1 // pred_check
      _
    $region19: #{tpu_custom_call.1} parent=1 // pred_check_branch
      %458 = sbr.rel (0) target = $region21
    $region20: #{tpu_custom_call.1} parent=1 // pred_region
      %460 = dma.done [#allocation3], 128
    $region21: #{tpu_custom_call.1} parent=1 // pred_fallthru
      _
    %461 = vsyncpa [#allocation3], 1

</llo_original>
